<compile_context>
chip_gen: v7x
topology: tpu7x:2x2x1
jax: 0.10.0
libtpu: 0.0.40
codegen_flags: <defaults>
</compile_context>

<pallas_src>
import jax
import jax.numpy as jnp
from jax.experimental import pallas as pl
from jax.experimental.pallas import tpu as pltpu


def pred_model_kernel(x_ref, w1_ref, b1_ref, w2_ref, b2_ref, w3_ref, b3_ref,
                      o_ref):
    """Fused MLP forward for one batch tile.

    x_ref : (bm, D)  f32   w1_ref: (D, 3D) bf16   b1_ref: (1, 3D) f32
                           w2_ref: (3D, D) bf16   b2_ref: (1, D)  f32
                           w3_ref: (1, D)  f32    b3_ref: (1, 1)  f32
    o_ref : (1, bm)  f32   -- lane-dense output row (batch on the lane axis)
    """
    x = x_ref[...].astype(jnp.bfloat16)

    # linear1 (MXU, bf16 operands, f32 accumulate) + bias + ReLU (VPU, f32)
    h1 = jnp.dot(x, w1_ref[...], preferred_element_type=jnp.float32)
    h1 = jnp.maximum(h1 + b1_ref[...], 0.0)
    # dropout(p=0.3): identity in inference mode.

    # linear2 (MXU) + bias + ReLU
    h2 = jnp.dot(h1.astype(jnp.bfloat16), w2_ref[...],
                 preferred_element_type=jnp.float32)
    h2 = jnp.maximum(h2 + b2_ref[...], 0.0)
    # dropout(p=0.3): identity in inference mode.

    # linear3 (out_features == 1), computed "transposed":
    #   (1, D) . (bm, D)^T -> (1, bm)
    # so the result is already lane-dense and the store is unmasked vst
    # (vs. bm/8 masked vst.msk stores for a (bm, 1) column output).
    h3 = jax.lax.dot_general(w3_ref[...], h2,
                             dimension_numbers=(((1,), (1,)), ((), ())),
                             preferred_element_type=jnp.float32)
    o_ref[...] = jnp.maximum(h3 + b3_ref[...], 0.0).astype(o_ref.dtype)


def pred_model_forward(x, params, *, bm=512):
    """Run PredModel forward. x: (B, D) float32 -> (B, 1) float32.

    B <= bm: one gridless invocation (one DMA in, fused compute, one DMA out).
    B  > bm: batch axis padded to a multiple of bm and tiled ("parallel").
    """
    B, D = x.shape
    H = 3 * D
    w1, b1, w2, b2, w3, b3 = params
    assert w1.shape == (D, H) and w2.shape == (H, D) and w3.shape == (D, 1)

    # bf16 weights for the two big matmuls (halves weight VMEM/HBM traffic,
    # full MXU bf16 rate); tiny w3 row / biases stay f32.
    w1b = w1.astype(jnp.bfloat16)
    w2b = w2.astype(jnp.bfloat16)
    w3_row = w3.reshape(1, D).astype(jnp.float32)
    b1 = b1.reshape(1, H).astype(jnp.float32)
    b2 = b2.reshape(1, D).astype(jnp.float32)
    b3 = b3.reshape(1, 1).astype(jnp.float32)

    if B <= bm:
        # Single gridless invocation; lane-dense (1, B) output row.
        out_row = pl.pallas_call(
            pred_model_kernel,
            out_shape=jax.ShapeDtypeStruct((1, B), jnp.float32),
        )(x, w1b, b1, w2b, b2, w3_row, b3)
        return out_row.reshape(B, 1)

    # ---- tiled path -------------------------------------------------------
    B_pad = pl.cdiv(B, bm) * bm
    x_pad = jnp.pad(x, ((0, B_pad - B), (0, 0))) if B_pad != B else x
    grid = (B_pad // bm,)

    # Rough VMEM footprint; raise the scoped limit only if we would exceed
    # v5e's ~16 MiB default (no-op at the demo size).
    weight_bytes = ((w1b.size + w2b.size) * 2
                    + (b1.size + b2.size + w3_row.size + b3.size) * 4)
    act_bytes = bm * (D * 4 * 2      # x tile, double-buffered
                      + H * 4 + D * 4  # h1 / h2 intermediates
                      + 4 * 2)       # (1, bm) output rows, double-buffered
    est_vmem = int(weight_bytes + act_bytes)
    vmem_limit = None
    if est_vmem > 12 * 1024 * 1024:
        vmem_limit = min(2 * est_vmem, 100 * 1024 * 1024)

    def call(single_buffer_weights):
        # Weights / biases: full array, constant index_map (never re-fetched).
        if single_buffer_weights:
            def wspec(a):
                return pl.BlockSpec(a.shape, lambda i: (0, 0),
                                    pipeline_mode=pl.Buffered(1))
        else:
            def wspec(a):
                return pl.BlockSpec(a.shape, lambda i: (0, 0))

        grid_spec = pltpu.PrefetchScalarGridSpec(
            num_scalar_prefetch=0,
            grid=grid,
            in_specs=[
                pl.BlockSpec((bm, D), lambda i: (i, 0)),   # x batch tile
                wspec(w1b), wspec(b1),                     # linear1
                wspec(w2b), wspec(b2),                     # linear2
                wspec(w3_row), wspec(b3),                  # linear3
            ],
            # Lane-dense output: each grid step writes lanes [i*bm, (i+1)*bm)
            # of a single (1, B_pad) row.
            out_specs=pl.BlockSpec((1, bm), lambda i: (0, i)),
        )
        return pl.pallas_call(
            pred_model_kernel,
            out_shape=jax.ShapeDtypeStruct((1, B_pad), jnp.float32),
            grid_spec=grid_spec,
            compiler_params=pltpu.CompilerParams(
                dimension_semantics=("parallel",),
                vmem_limit_bytes=vmem_limit),
        )(x_pad, w1b, b1, w2b, b2, w3_row, b3)

    try:
        out_row = call(True)          # single-buffered invariant weights
    except Exception:
        out_row = call(False)         # fallback: default double buffering
    return out_row.reshape(B_pad, 1)[:B]


def init_params(key, inputsize):
    """Deterministic init mimicking nn.Linear default (uniform +/- 1/sqrt(fan_in))."""
    D, H = inputsize, 3 * inputsize
    ks = jax.random.split(key, 6)

    def lin(kw, kb, fan_in, fan_out):
        bound = 1.0 / jnp.sqrt(fan_in)
        w = jax.random.uniform(kw, (fan_in, fan_out), jnp.float32, -bound, bound)
        b = jax.random.uniform(kb, (1, fan_out), jnp.float32, -bound, bound)
        return w, b

    w1, b1 = lin(ks[0], ks[1], D, H)
    w2, b2 = lin(ks[2], ks[3], H, D)
    w3, b3 = lin(ks[4], ks[5], D, 1)
    return (w1, b1, w2, b2, w3, b3)


def reference_forward(x, params):
    """Pure-JAX reference using the same bf16-operand / f32-accumulate math."""
    w1, b1, w2, b2, w3, b3 = params
    h = jnp.dot(x.astype(jnp.bfloat16), w1.astype(jnp.bfloat16),
                preferred_element_type=jnp.float32)
    h = jnp.maximum(h + b1.reshape(1, -1), 0.0)
    h = jnp.dot(h.astype(jnp.bfloat16), w2.astype(jnp.bfloat16),
                preferred_element_type=jnp.float32)
    h = jnp.maximum(h + b2.reshape(1, -1), 0.0)
    h = jnp.dot(h, w3.reshape(-1, 1)) + b3.reshape(1, 1)
    return jnp.maximum(h, 0.0)


if __name__ == "__main__":
    key = jax.random.PRNGKey(0)
    k_x1, k_x2, k_x3, k_p = jax.random.split(key, 4)

    D = 32                        # inputsize=32 -> hidden = 96
    params = init_params(k_p, D)

    # 1) Small batch: gridless path.
    x1 = jax.random.normal(k_x1, (16, D), dtype=jnp.float32)
    out1 = jax.block_until_ready(pred_model_forward(x1, params))
    assert out1.shape == (16, 1)
    assert jnp.allclose(out1, reference_forward(x1, params),
                        atol=1e-3, rtol=1e-3), "small-batch mismatch"

    # 2) Tiled path, batch divisible by the tile (grid of 2 parallel steps).
    x2 = jax.random.normal(k_x2, (1024, D), dtype=jnp.float32)
    out2 = jax.block_until_ready(pred_model_forward(x2, params, bm=512))
    assert out2.shape == (1024, 1)
    assert jnp.allclose(out2, reference_forward(x2, params),
                        atol=1e-3, rtol=1e-3), "tiled-batch mismatch"

    # 3) Tiled path, ragged batch (padded to a multiple of bm in the wrapper).
    x3 = jax.random.normal(k_x3, (600, D), dtype=jnp.float32)
    out3 = jax.block_until_ready(pred_model_forward(x3, params, bm=512))
    assert out3.shape == (600, 1)
    assert jnp.allclose(out3, reference_forward(x3, params),
                        atol=1e-3, rtol=1e-3), "ragged-batch mismatch"

    print("KERNEL_OK")
</pallas_src>

<mosaic_0001>
module attributes {stable_mosaic.version = 11 : i64} {
  func.func @pred_model_kernel(%arg0: memref<16x32xf32, #tpu.memory_space<vmem>>, %arg1: memref<32x96xbf16, #tpu.memory_space<vmem>>, %arg2: memref<1x96xf32, #tpu.memory_space<vmem>>, %arg3: memref<96x32xbf16, #tpu.memory_space<vmem>>, %arg4: memref<1x32xf32, #tpu.memory_space<vmem>>, %arg5: memref<1x32xf32, #tpu.memory_space<vmem>>, %arg6: memref<1x1xf32, #tpu.memory_space<vmem>>, %arg7: memref<1x16xf32, #tpu.memory_space<vmem>>) attributes {dimension_semantics = [], scalar_prefetch = 0 : i64, scratch_operands = 0 : i64, tpu.core_type = #tpu.core_type<tc>} {
    %c0 = arith.constant 0 : index
    %c0_0 = arith.constant 0 : index
    %0 = vector.load %arg0[%c0, %c0_0] : memref<16x32xf32, #tpu.memory_space<vmem>>, vector<16x32xf32>
    %1 = arith.truncf %0 : vector<16x32xf32> to vector<16x32xbf16>
    %c0_1 = arith.constant 0 : index
    %c0_2 = arith.constant 0 : index
    %2 = vector.load %arg1[%c0_1, %c0_2] : memref<32x96xbf16, #tpu.memory_space<vmem>>, vector<32x96xbf16>
    %cst = arith.constant dense<0.000000e+00> : vector<16x96xf32>
    %3 = tpu.matmul %1, %2, %cst {dimension_numbers = #tpu.dot_dimension_numbers<[1], [0], [0], [1], [0, 0, 1, 1], [], []>} : vector<16x32xbf16>, vector<32x96xbf16>, vector<16x96xf32> -> vector<16x96xf32>
    %c0_3 = arith.constant 0 : index
    %c0_4 = arith.constant 0 : index
    %4 = vector.load %arg2[%c0_3, %c0_4] : memref<1x96xf32, #tpu.memory_space<vmem>>, vector<1x96xf32>
    %5 = vector.broadcast %4 : vector<1x96xf32> to vector<16x96xf32>
    %6 = arith.addf %3, %5 : vector<16x96xf32>
    %cst_5 = arith.constant 0.000000e+00 : f32
    %7 = vector.broadcast %cst_5 : f32 to vector<16x96xf32>
    %8 = arith.maximumf %6, %7 : vector<16x96xf32>
    %9 = arith.truncf %8 : vector<16x96xf32> to vector<16x96xbf16>
    %c0_6 = arith.constant 0 : index
    %c0_7 = arith.constant 0 : index
    %10 = vector.load %arg3[%c0_6, %c0_7] : memref<96x32xbf16, #tpu.memory_space<vmem>>, vector<96x32xbf16>
    %cst_8 = arith.constant dense<0.000000e+00> : vector<16x32xf32>
    %11 = tpu.matmul %9, %10, %cst_8 {dimension_numbers = #tpu.dot_dimension_numbers<[1], [0], [0], [1], [0, 0, 1, 1], [], []>} : vector<16x96xbf16>, vector<96x32xbf16>, vector<16x32xf32> -> vector<16x32xf32>
    %c0_9 = arith.constant 0 : index
    %c0_10 = arith.constant 0 : index
    %12 = vector.load %arg4[%c0_9, %c0_10] : memref<1x32xf32, #tpu.memory_space<vmem>>, vector<1x32xf32>
    %13 = vector.broadcast %12 : vector<1x32xf32> to vector<16x32xf32>
    %14 = arith.addf %11, %13 : vector<16x32xf32>
    %cst_11 = arith.constant 0.000000e+00 : f32
    %15 = vector.broadcast %cst_11 : f32 to vector<16x32xf32>
    %16 = arith.maximumf %14, %15 : vector<16x32xf32>
    %c0_12 = arith.constant 0 : index
    %c0_13 = arith.constant 0 : index
    %17 = vector.load %arg5[%c0_12, %c0_13] : memref<1x32xf32, #tpu.memory_space<vmem>>, vector<1x32xf32>
    %cst_14 = arith.constant dense<0.000000e+00> : vector<1x16xf32>
    %18 = tpu.matmul %17, %16, %cst_14 {dimension_numbers = #tpu.dot_dimension_numbers<[1], [1], [0], [0], [0, 0, 1, 0], [], []>} : vector<1x32xf32>, vector<16x32xf32>, vector<1x16xf32> -> vector<1x16xf32>
    %c0_15 = arith.constant 0 : index
    %c0_16 = arith.constant 0 : index
    %19 = vector.load %arg6[%c0_15, %c0_16] : memref<1x1xf32, #tpu.memory_space<vmem>>, vector<1x1xf32>
    %20 = vector.broadcast %19 : vector<1x1xf32> to vector<1x16xf32>
    %21 = arith.addf %18, %20 : vector<1x16xf32>
    %cst_17 = arith.constant 0.000000e+00 : f32
    %22 = vector.broadcast %cst_17 : f32 to vector<1x16xf32>
    %23 = arith.maximumf %21, %22 : vector<1x16xf32>
    %c0_18 = arith.constant 0 : index
    %c0_19 = arith.constant 0 : index
    %24 = vector.load %arg7[%c0_18, %c0_19] : memref<1x16xf32, #tpu.memory_space<vmem>>, vector<1x16xf32>
    tpu.vector_store %arg7[%c0_18, %c0_19], %23 {strides = array<i32>} : memref<1x16xf32, #tpu.memory_space<vmem>>, vector<1x16xf32>,
    return
  }
}

</mosaic_0001>

<llo_original>
// kernel: tpu_custom_call.1
$region0: #{tpu_custom_call.1}
  #allocation0 [shape = 'u32[]', space=smem, size = 0x4, offset = 0x4, fixed_abs, tag = 'smem constant byte address 0x4 - core index']
  #allocation1 [shape = 'u32[144,128]{1,0:T(1,128)}', space=vmem, size = 0x12000, scoped, tag = 'internal scratch']
  #allocation2 [shape = 'f32[1,1]{1,0:T(1,128)S(1)}', space=vmem, size = 0x200, scoped, tag = 'scoped memory for tpu_custom_call.1']
  %s0 = inlined_call_operand.vmem [shape: f32[16,32], index: 0, kind: input, shape index: {}]
  %s1 = inlined_call_operand.vmem [shape: bf16[32,96], index: 1, kind: input, shape index: {}]
  %s2 = inlined_call_operand.vmem [shape: f32[1,96], index: 2, kind: input, shape index: {}]
  %s3 = inlined_call_operand.vmem [shape: bf16[96,32], index: 3, kind: input, shape index: {}]
  %s4 = inlined_call_operand.vmem [shape: f32[1,32], index: 4, kind: input, shape index: {}]
  %s5 = inlined_call_operand.vmem [shape: f32[1,32], index: 5, kind: input, shape index: {}]
  %s6 = inlined_call_operand.<no memory space> [shape: f32[1,1], index: 6, kind: input, shape index: {}]
  %s7 = inlined_call_operand.hbm [shape: f32[1,16], index: 7, kind: output, shape index: {}]
  %s8 = sld [smem:[#allocation0]]
  $region38: #{tpu_custom_call.1} parent=0
    _
  %s10 = ssub.s32 1, %s8
  %s11 = scalar_select 0, %s10, %s8
  %v12 = vstv %s6
  %13 = vst [vmem:[#allocation2] sm:$0x1] %v12
  $region1: #{tpu_custom_call.1} parent=0
    #allocation3 [shape = 'u8[512]{0}', space=vmem, size = 0x400, scoped, tag = 'output window, operand 0, single buffered']
    #allocation4 [shape = 's32[1]{0}', space=sflag, size = 0x4, scoped, tag = 'scoped memory for tpu_custom_call.1']
    %14 = vsyncpa [#allocation4], 0
    // Predicated region
    $region2: #{tpu_custom_call.1} parent=1 // pred_check
      _
    $region3: #{tpu_custom_call.1} parent=1 // pred_check_branch
      %16 = sbr.rel (0) target = $region5
    $region4: #{tpu_custom_call.1} parent=1 // pred_region
      _
    $region5: #{tpu_custom_call.1} parent=1 // pred_fallthru
      _
    // Predicated region
    $region6: #{tpu_custom_call.1} parent=1 // pred_check
      _
    $region7: #{tpu_custom_call.1} parent=1 // pred_check_branch
      %18 = sbr.rel (0) target = $region9
    $region8: #{tpu_custom_call.1} parent=1 // pred_region
      _
    $region9: #{tpu_custom_call.1} parent=1 // pred_fallthru
      _
    // Predicated region
    $region10: #{tpu_custom_call.1} parent=1 // pred_check
      _
    $region11: #{tpu_custom_call.1} parent=1 // pred_check_branch
      %20 = sbr.rel (0) target = $region13
    $region12: #{tpu_custom_call.1} parent=1 // pred_region
      _
    $region13: #{tpu_custom_call.1} parent=1 // pred_fallthru
      _
    // Predicated region
    $region14: #{tpu_custom_call.1} parent=1 // pred_check
      _
    $region15: #{tpu_custom_call.1} parent=1 // pred_check_branch
      %22 = sbr.rel (0) target = $region17
    $region16: #{tpu_custom_call.1} parent=1 // pred_region
      _
    $region17: #{tpu_custom_call.1} parent=1 // pred_fallthru
      _
    // Predicated region
    $region18: #{tpu_custom_call.1} parent=1 // pred_check
      _
    $region19: #{tpu_custom_call.1} parent=1 // pred_check_branch
      %24 = sbr.rel (0) target = $region21
    $region20: #{tpu_custom_call.1} parent=1 // pred_region
      _
    $region21: #{tpu_custom_call.1} parent=1 // pred_fallthru
      _
    // Predicated region
    $region22: #{tpu_custom_call.1} parent=1 // pred_check
      _
    $region23: #{tpu_custom_call.1} parent=1 // pred_check_branch
      %26 = sbr.rel (0) target = $region25
    $region24: #{tpu_custom_call.1} parent=1 // pred_region
      _
    $region25: #{tpu_custom_call.1} parent=1 // pred_fallthru
      _
    // Predicated region
    $region26: #{tpu_custom_call.1} parent=1 // pred_check
      _
    $region27: #{tpu_custom_call.1} parent=1 // pred_check_branch
      %28 = sbr.rel (0) target = $region29
    $region28: #{tpu_custom_call.1} parent=1 // pred_region
      _
    $region29: #{tpu_custom_call.1} parent=1 // pred_fallthru
      _
    %v30 = vld [vmem:[%s0] sm:$0xff]
    %v31 = vld [vmem:[%s0 + $0x8] sm:$0xff]
    %v32 = vpack.c.bf16 %v31, %v30
    %v33 = vld [vmem:[%s1] sm:$0xf]
    %v34 = vld [vmem:[%s1 + $0x4] sm:$0xf]
    %v35 = vld [vmem:[%s1 + $0x8] sm:$0xf]
    %v36 = vld [vmem:[%s1 + $0xc] sm:$0xf]
    %v37 = vld [vmem:[%s2] sm:$0x1]
    %v39 = vlaneseq
    %v40 = vshrl.u32 %v39, 7
    %v41 = vsub.s32 0, %v40
    %v42 = vrot.slane %v37, %v41
    %v48 = vunpack.c.l.b16 %v33
    %v49 = vunpack.c.l.b16 %v34
    %v50 = vunpack.c.l.b16 %v35
    %v51 = vunpack.c.l.b16 %v36
    %v52 = vpack.c.b16 %v49, %v48
    %v53 = vpack.c.b16 %v51, %v50
    %vm56 = vcmask 261120
    %v58 = vsel %vm56, %v32, 0
    %60 = vmatprep.subr.bf16.mxu0 0
    %61 = vmatpush1.bf16.msra.mxu0 %v52
    %62 = vmatprep.subr.bf16.mxu0 0
    %63 = vmatpush1.bf16.msra.mxu0 %v53
    %64 = vmatprep.subr.bf16.mxu0 0
    %65 = vmatpush1.bf16.msra.mxu0 0
    %66 = vmatprep.subr.bf16.mxu0 0
    %67 = vmatpush1.bf16.msra.mxu0 0
    %68 = vmatprep.subr.bf16.mxu0 0
    %69 = vmatpush1.bf16.msra.mxu0 0
    %70 = vmatprep.subr.bf16.mxu0 0
    %71 = vmatpush1.bf16.msra.mxu0 0
    %72 = vmatprep.subr.bf16.mxu0 0
    %73 = vmatpush1.bf16.msra.mxu0 0
    %74 = vmatprep.subr.bf16.mxu0 0
    %75 = vmatpush1.bf16.msra.mxu0 0
    %76 = vmatprep.subr.bf16.mxu0 0
    %77 = vmatpush1.bf16.msra.mxu0 0
    %78 = vmatprep.subr.bf16.mxu0 0
    %79 = vmatpush1.bf16.msra.mxu0 0
    %80 = vmatprep.subr.bf16.mxu0 0
    %81 = vmatpush1.bf16.msra.mxu0 0
    %82 = vmatprep.subr.bf16.mxu0 0
    %83 = vmatpush1.bf16.msra.mxu0 0
    %84 = vmatprep.subr.bf16.mxu0 0
    %85 = vmatpush1.bf16.msra.mxu0 0
    %86 = vmatprep.subr.bf16.mxu0 0
    %87 = vmatpush1.bf16.msra.mxu0 0
    %88 = vmatprep.subr.bf16.mxu0 0
    %89 = vmatpush1.bf16.msra.mxu0 0
    %90 = vmatprep.subr.bf16.mxu0 0
    %91 = vmatpush1.bf16.msra.mxu0 0
    %92 = vmatprep.mubr.bf16.mxu0 0
    %93 = vmatmul.mubr.bf16.gmra.mrb[0].mxu0 %v58
    %v94 = vpop.f32.mrb[0].mxu0
    %v95 = vadd.f32 %v42, %v94
    %v96 = vpop.f32.mrb[0].mxu0
    %v97 = vpop.f32.mrb[0].mxu0
    %v98 = vadd.f32 %v42, %v97
    %v99 = vpop.f32.mrb[0].mxu0
    %100 = vdwg.mxu0
    %v101 = vmax.f32 %v95, 0.0
    %v102 = vmax.f32 %v98, 0.0
    %v103 = vpack.c.bf16 %v102, %v101
    %v104 = vld [vmem:[%s3] sm:$0xf]
    %v105 = vld [vmem:[%s3 + $0x4] sm:$0xf]
    %v106 = vld [vmem:[%s3 + $0x8] sm:$0xf]
    %v107 = vld [vmem:[%s3 + $0xc] sm:$0xf]
    %v108 = vld [vmem:[%s3 + $0x10] sm:$0xf]
    %v109 = vld [vmem:[%s3 + $0x14] sm:$0xf]
    %v110 = vld [vmem:[%s3 + $0x18] sm:$0xf]
    %v111 = vld [vmem:[%s3 + $0x1c] sm:$0xf]
    %v112 = vld [vmem:[%s3 + $0x20] sm:$0xf]
    %v113 = vld [vmem:[%s3 + $0x24] sm:$0xf]
    %v114 = vld [vmem:[%s3 + $0x28] sm:$0xf]
    %v115 = vld [vmem:[%s3 + $0x2c] sm:$0xf]
    %v116 = vld [vmem:[%s4] sm:$0x1]
    %v118 = vlaneseq
    %v119 = vshrl.u32 %v118, 7
    %v120 = vsub.s32 0, %v119
    %v121 = vrot.slane %v116, %v120
    %v135 = vunpack.c.l.b16 %v104
    %v136 = vunpack.c.l.b16 %v105
    %v137 = vunpack.c.l.b16 %v106
    %v138 = vunpack.c.l.b16 %v107
    %v139 = vunpack.c.l.b16 %v108
    %v140 = vunpack.c.l.b16 %v109
    %v141 = vunpack.c.l.b16 %v110
    %v142 = vunpack.c.l.b16 %v111
    %v143 = vunpack.c.l.b16 %v112
    %v144 = vunpack.c.l.b16 %v113
    %v145 = vunpack.c.l.b16 %v114
    %v146 = vunpack.c.l.b16 %v115
    %v147 = vpack.c.b16 %v136, %v135
    %v148 = vpack.c.b16 %v138, %v137
    %v149 = vpack.c.b16 %v140, %v139
    %v150 = vpack.c.b16 %v142, %v141
    %v151 = vpack.c.b16 %v144, %v143
    %v152 = vpack.c.b16 %v146, %v145
    %vm159 = vcmask 785408
    %v161 = vsel %vm159, %v103, 0
    %163 = vmatprep.subr.bf16.mxu0 0
    %164 = vmatpush1.bf16.msra.mxu0 %v147
    %165 = vmatprep.subr.bf16.mxu0 0
    %166 = vmatpush1.bf16.msra.mxu0 %v148
    %167 = vmatprep.subr.bf16.mxu0 0
    %168 = vmatpush1.bf16.msra.mxu0 %v149
    %169 = vmatprep.subr.bf16.mxu0 0
    %170 = vmatpush1.bf16.msra.mxu0 %v150
    %171 = vmatprep.subr.bf16.mxu0 0
    %172 = vmatpush1.bf16.msra.mxu0 %v151
    %173 = vmatprep.subr.bf16.mxu0 0
    %174 = vmatpush1.bf16.msra.mxu0 %v152
    %175 = vmatprep.subr.bf16.mxu0 0
    %176 = vmatpush1.bf16.msra.mxu0 0
    %177 = vmatprep.subr.bf16.mxu0 0
    %178 = vmatpush1.bf16.msra.mxu0 0
    %179 = vmatprep.subr.bf16.mxu0 0
    %180 = vmatpush1.bf16.msra.mxu0 0
    %181 = vmatprep.subr.bf16.mxu0 0
    %182 = vmatpush1.bf16.msra.mxu0 0
    %183 = vmatprep.subr.bf16.mxu0 0
    %184 = vmatpush1.bf16.msra.mxu0 0
    %185 = vmatprep.subr.bf16.mxu0 0
    %186 = vmatpush1.bf16.msra.mxu0 0
    %187 = vmatprep.subr.bf16.mxu0 0
    %188 = vmatpush1.bf16.msra.mxu0 0
    %189 = vmatprep.subr.bf16.mxu0 0
    %190 = vmatpush1.bf16.msra.mxu0 0
    %191 = vmatprep.subr.bf16.mxu0 0
    %192 = vmatpush1.bf16.msra.mxu0 0
    %193 = vmatprep.subr.bf16.mxu0 0
    %194 = vmatpush1.bf16.msra.mxu0 0
    %195 = vmatprep.mubr.bf16.mxu0 0
    %196 = vmatmul.mubr.bf16.gmra.mrb[0].mxu0 %v161
    %v197 = vpop.f32.mrb[0].mxu0
    %v198 = vadd.f32 %v121, %v197
    %v199 = vpop.f32.mrb[0].mxu0
    %v200 = vpop.f32.mrb[0].mxu0
    %v201 = vadd.f32 %v121, %v200
    %v202 = vpop.f32.mrb[0].mxu0
    %203 = vdwg.mxu0
    %v204 = vmax.f32 %v198, 0.0
    %v205 = vmax.f32 %v201, 0.0
    %v206 = vld [vmem:[%s5] sm:$0x1]
    %v207 = vld [vmem:[#allocation2] sm:$0x1]
    %209 = vset.pattern.permute.xlu0 0
    %210 = vperm.xlu0 %209, %v207
    %v211 = vpop.permute.xlu0 %210
    %v213 = vlaneseq
    %v214 = vshrl.u32 %v213, 7
    %v215 = vsub.s32 0, %v214
    %v216 = vrot.slane %v211, %v215
    %v218 = vsel %vm56, %v206, 0
    %v221 = vsel %vm56, %v204, 0
    %v224 = vsel %vm56, %v205, 0
    %226 = vmatprep.subr.mxu0 0.0
    %227 = vmatpush1.xpose.msra.mxu0 %v221
    %228 = vmatprep.subr.mxu0 0.0
    %229 = vmatpush1.xpose.msra.mxu0 %v224
    %230 = vmatprep.subr.mxu0 0.0
    %231 = vmatpush1.xpose.msra.mxu0 0.0
    %232 = vmatprep.subr.mxu0 0.0
    %233 = vmatpush1.xpose.msra.mxu0 0.0
    %234 = vmatprep.subr.mxu0 0.0
    %235 = vmatpush1.xpose.msra.mxu0 0.0
    %236 = vmatprep.subr.mxu0 0.0
    %237 = vmatpush1.xpose.msra.mxu0 0.0
    %238 = vmatprep.subr.mxu0 0.0
    %239 = vmatpush1.xpose.msra.mxu0 0.0
    %240 = vmatprep.subr.mxu0 0.0
    %241 = vmatpush1.xpose.msra.mxu0 0.0
    %242 = vmatprep.subr.mxu0 0.0
    %243 = vmatpush1.xpose.msra.mxu0 0.0
    %244 = vmatprep.subr.mxu0 0.0
    %245 = vmatpush1.xpose.msra.mxu0 0.0
    %246 = vmatprep.subr.mxu0 0.0
    %247 = vmatpush1.xpose.msra.mxu0 0.0
    %248 = vmatprep.subr.mxu0 0.0
    %249 = vmatpush1.xpose.msra.mxu0 0.0
    %250 = vmatprep.subr.mxu0 0.0
    %251 = vmatpush1.xpose.msra.mxu0 0.0
    %252 = vmatprep.subr.mxu0 0.0
    %253 = vmatpush1.xpose.msra.mxu0 0.0
    %254 = vmatprep.subr.mxu0 0.0
    %255 = vmatpush1.xpose.msra.mxu0 0.0
    %256 = vmatprep.subr.mxu0 0.0
    %257 = vmatpush1.xpose.msra.mxu0 0.0
    %258 = vmatprep.subr.mxu0 0.0
    %259 = vmatpush1.xpose.msra.mxu0 0.0
    %260 = vmatprep.subr.mxu0 0.0
    %261 = vmatpush1.xpose.msra.mxu0 0.0
    %262 = vmatprep.subr.mxu0 0.0
    %263 = vmatpush1.xpose.msra.mxu0 0.0
    %264 = vmatprep.subr.mxu0 0.0
    %265 = vmatpush1.xpose.msra.mxu0 0.0
    %266 = vmatprep.subr.mxu0 0.0
    %267 = vmatpush1.xpose.msra.mxu0 0.0
    %268 = vmatprep.subr.mxu0 0.0
    %269 = vmatpush1.xpose.msra.mxu0 0.0
    %270 = vmatprep.subr.mxu0 0.0
    %271 = vmatpush1.xpose.msra.mxu0 0.0
    %272 = vmatprep.subr.mxu0 0.0
    %273 = vmatpush1.xpose.msra.mxu0 0.0
    %274 = vmatprep.subr.mxu0 0.0
    %275 = vmatpush1.xpose.msra.mxu0 0.0
    %276 = vmatprep.subr.mxu0 0.0
    %277 = vmatpush1.xpose.msra.mxu0 0.0
    %278 = vmatprep.subr.mxu0 0.0
    %279 = vmatpush1.xpose.msra.mxu0 0.0
    %280 = vmatprep.subr.mxu0 0.0
    %281 = vmatpush1.xpose.msra.mxu0 0.0
    %282 = vmatprep.subr.mxu0 0.0
    %283 = vmatpush1.xpose.msra.mxu0 0.0
    %284 = vmatprep.subr.mxu0 0.0
    %285 = vmatpush1.xpose.msra.mxu0 0.0
    %286 = vmatprep.subr.mxu0 0.0
    %287 = vmatpush1.xpose.msra.mxu0 0.0
    %288 = vmatprep.subr.mxu0 0.0
    %289 = vmatpush1.xpose.msra.mxu0 0.0
    %290 = vmatprep.mubr.f32.mxu0 0.0
    %291 = vmatmul.mubr.f32.gmra.mrb[0].mxu0 %v218
    %v292 = vpop.f32.mrb[0].mxu0
    %v293 = vadd.f32 %v216, %v292
    %v294 = vpop.f32.mrb[0].mxu0
    %295 = vdwg.mxu0
    %v296 = vmax.f32 %v293, 0.0
    %vm297 = vcmask 122880
    %298 = vst.msk [vmem:[#allocation3] sm:$0x1] %vm297, %v296
    // Predicated region
    $region30: #{tpu_custom_call.1} parent=1 // pred_check
      _
    $region31: #{tpu_custom_call.1} parent=1 // pred_check_branch
      %300 = sbr.rel (0) target = $region33
    $region32: #{tpu_custom_call.1} parent=1 // pred_region
      %s302 = ssub.s32 16, 16
      %303 = vsyncadd [#allocation4], %s302
      %s305 = sshll.u32 [#allocation3], 4
      %s306 = int_to_ptr.vmem [resolvable:$true] %s305
      %308 = dma.vmem_to_hbm [thread:$0]  %s306, 16, %s7, [#allocation4]
    $region33: #{tpu_custom_call.1} parent=1 // pred_fallthru
      _
    // Predicated region
    $region34: #{tpu_custom_call.1} parent=1 // pred_check
      _
    $region35: #{tpu_custom_call.1} parent=1 // pred_check_branch
      %310 = sbr.rel (0) target = $region37
    $region36: #{tpu_custom_call.1} parent=1 // pred_region
      %311 = dma.done [#allocation4], 16
    $region37: #{tpu_custom_call.1} parent=1 // pred_fallthru
      _
    %312 = vsyncpa [#allocation4], 1

</llo_original>
